<compile_context>
chip_gen: v5e
topology: v5e:2x2
jax: 0.10.0
libtpu: 0.0.40
codegen_flags: <defaults>
</compile_context>

<pallas_src>
import functools

import jax
import jax.numpy as jnp
from jax.experimental import pallas as pl
from jax.experimental.pallas import tpu as pltpu


def _round_up(x, m):
    return (x + m - 1) // m * m


# ----------------------------------------------------------------------------
# Pallas kernel
# ----------------------------------------------------------------------------
def _conv1x1_kernel(x_ref, w_ref, b_ref, o_ref):
    # x_ref: (Cin, tile)    -- spatial tile on lanes, Cin on sublanes
    # w_ref: (cout_p, Cin)  -- weight-stationary (constant block index)
    # b_ref: (cout_p, 1)
    # o_ref: (cout_p, tile)
    o_ref[...] = (
        jnp.dot(w_ref[...], x_ref[...], preferred_element_type=jnp.float32)
        + b_ref[...]
    )


# ----------------------------------------------------------------------------
# Wrapper: PyTorch-layout in/out, padding + tiling plumbing
# ----------------------------------------------------------------------------
def out_conv(x_nchw, weight, bias, *, tile=2048):
    """OutConv.forward: nn.Conv2d(in_channels, out_channels, kernel_size=1).

    x_nchw : (N, Cin, H, W)    float32  (PyTorch NCHW layout)
    weight : (Cout, Cin, 1, 1) float32  (PyTorch Conv2d weight layout)
    bias   : (Cout,)           float32
    returns: (N, Cout, H, W)   float32
    """
    n, cin, h, w = x_nchw.shape
    cout = weight.shape[0]
    hw = h * w

    # Spatial tile on lanes: multiple of 128, capped by the (padded) map size.
    tile = min(tile, _round_up(hw, 128))
    # v7x has 2 TensorCores: keep >= 2 parallel grid steps when possible.
    if n == 1 and hw > 128:
        tile = min(tile, _round_up((hw + 1) // 2, 128))
    hw_p = _round_up(hw, tile)

    # Cout padded only to the 8-sublane granule (vs 128 lanes previously).
    cout_p = _round_up(cout, 8)

    # Native NCHW view: (N, Cin, H*W) -- a pure reshape, no transpose pass.
    x3 = x_nchw.reshape(n, cin, hw)
    if hw_p != hw:
        x3 = jnp.pad(x3, ((0, 0), (0, 0), (0, hw_p - hw)))

    w2 = weight.reshape(cout, cin).astype(jnp.float32)
    w_p = jnp.pad(w2, ((0, cout_p - cout), (0, 0)))                  # (cout_p, Cin)
    b_p = jnp.pad(bias.astype(jnp.float32), (0, cout_p - cout)).reshape(cout_p, 1)

    out = pl.pallas_call(
        _conv1x1_kernel,
        out_shape=jax.ShapeDtypeStruct((n, cout_p, hw_p), jnp.float32),
        grid_spec=pltpu.PrefetchScalarGridSpec(
            num_scalar_prefetch=0,
            grid=(n, hw_p // tile),
            in_specs=[
                pl.BlockSpec((pl.Squeezed(), cin, tile), lambda b, j: (b, 0, j)),
                pl.BlockSpec((cout_p, cin), lambda b, j: (0, 0)),
                pl.BlockSpec((cout_p, 1), lambda b, j: (0, 0)),
            ],
            out_specs=pl.BlockSpec(
                (pl.Squeezed(), cout_p, tile), lambda b, j: (b, 0, j)
            ),
        ),
        compiler_params=pltpu.CompilerParams(
            dimension_semantics=("parallel", "parallel"),
        ),
    )(x3, w_p, b_p)

    # Cheap sublane slice back to the real Cout; output is already NCHW.
    return out[:, :cout, :hw].reshape(n, cout, h, w)


out_conv_jit = jax.jit(functools.partial(out_conv))


# ----------------------------------------------------------------------------
if __name__ == "__main__":
    key = jax.random.PRNGKey(0)
    k_x, k_w, k_b = jax.random.split(key, 3)

    # Small shapes consistent with UNet's OutConv: 64 -> n_classes channels.
    N, C_IN, H, W = 2, 64, 16, 16
    C_OUT = 3

    x = jax.random.normal(k_x, (N, C_IN, H, W), jnp.float32)          # NCHW
    weight = jax.random.normal(k_w, (C_OUT, C_IN, 1, 1), jnp.float32) * (1.0 / C_IN) ** 0.5
    bias = jax.random.normal(k_b, (C_OUT,), jnp.float32) * 0.01

    logits = out_conv_jit(x, weight, bias)
    logits = jax.block_until_ready(logits)

    assert logits.shape == (N, C_OUT, H, W), logits.shape
    assert bool(jnp.all(jnp.isfinite(logits)))

    # Reference (pure-JAX) 1x1 conv for correctness.
    ref = jnp.einsum("nchw,oc->nohw", x, weight.reshape(C_OUT, C_IN)) \
        + bias[None, :, None, None]
    assert bool(jnp.allclose(logits, ref, atol=1e-5, rtol=1e-5)), \
        float(jnp.max(jnp.abs(logits - ref)))

    print("KERNEL_OK")
</pallas_src>

<mosaic_0001>
module attributes {stable_mosaic.version = 11 : i64} {
  func.func @_conv1x1_kernel(%arg0: i32, %arg1: i32, %arg2: memref<1x64x256xf32, #tpu.memory_space<vmem>>, %arg3: memref<8x64xf32, #tpu.memory_space<vmem>>, %arg4: memref<8x1xf32, #tpu.memory_space<vmem>>, %arg5: memref<1x8x256xf32, #tpu.memory_space<vmem>>) attributes {dimension_semantics = [#tpu.dimension_semantics<parallel>, #tpu.dimension_semantics<parallel>], iteration_bounds = array<i64: 2, 1>, scalar_prefetch = 0 : i64, scratch_operands = 0 : i64, tpu.core_type = #tpu.core_type<tc>, window_params = [{transform_indices = @transform_0, window_bounds = array<i64: 1, 64, 256>}, {pipeline_mode = #tpu.pipeline_mode<synchronous>, transform_indices = @transform_1, window_bounds = array<i64: 8, 64>}, {pipeline_mode = #tpu.pipeline_mode<synchronous>, transform_indices = @transform_2, window_bounds = array<i64: 8, 1>}, {transform_indices = @transform_3, window_bounds = array<i64: 1, 8, 256>}]} {
    %c0 = arith.constant 0 : index
    %c0_0 = arith.constant 0 : index
    %0 = vector.load %arg3[%c0, %c0_0] : memref<8x64xf32, #tpu.memory_space<vmem>>, vector<8x64xf32>
    %c0_1 = arith.constant 0 : index
    %c0_2 = arith.constant 0 : index
    %c0_3 = arith.constant 0 : index
    %1 = vector.load %arg2[%c0_1, %c0_2, %c0_3] : memref<1x64x256xf32, #tpu.memory_space<vmem>>, vector<1x64x256xf32>
    %2 = vector.shape_cast %1 : vector<1x64x256xf32> to vector<64x256xf32>
    %cst = arith.constant dense<0.000000e+00> : vector<8x256xf32>
    %3 = tpu.matmul %0, %2, %cst {dimension_numbers = #tpu.dot_dimension_numbers<[1], [0], [0], [1], [0, 0, 1, 1], [], []>} : vector<8x64xf32>, vector<64x256xf32>, vector<8x256xf32> -> vector<8x256xf32>
    %c0_4 = arith.constant 0 : index
    %c0_5 = arith.constant 0 : index
    %4 = vector.load %arg4[%c0_4, %c0_5] : memref<8x1xf32, #tpu.memory_space<vmem>>, vector<8x1xf32>
    %5 = vector.broadcast %4 : vector<8x1xf32> to vector<8x256xf32>
    %6 = arith.addf %3, %5 : vector<8x256xf32>
    %c0_6 = arith.constant 0 : index
    %c0_7 = arith.constant 0 : index
    %c0_8 = arith.constant 0 : index
    %7 = vector.load %arg5[%c0_6, %c0_7, %c0_8] : memref<1x8x256xf32, #tpu.memory_space<vmem>>, vector<1x8x256xf32>
    %8 = vector.shape_cast %7 : vector<1x8x256xf32> to vector<8x256xf32>
    %9 = vector.shape_cast %6 : vector<8x256xf32> to vector<1x8x256xf32>
    tpu.vector_store %arg5[%c0_6, %c0_7, %c0_8], %9 {strides = array<i32>} : memref<1x8x256xf32, #tpu.memory_space<vmem>>, vector<1x8x256xf32>,
    return
  }
  func.func @transform_0(%arg0: i32, %arg1: i32) -> (i32, i32, i32) {
    %c0_i32 = arith.constant 0 : i32
    %c0_i32_0 = arith.constant 0 : i32
    return %arg0, %c0_i32, %arg1 : i32, i32, i32
  }
  func.func @transform_1(%arg0: i32, %arg1: i32) -> (i32, i32) {
    %c0_i32 = arith.constant 0 : i32
    %c0_i32_0 = arith.constant 0 : i32
    %c0_i32_1 = arith.constant 0 : i32
    return %c0_i32, %c0_i32_0 : i32, i32
  }
  func.func @transform_2(%arg0: i32, %arg1: i32) -> (i32, i32) {
    %c0_i32 = arith.constant 0 : i32
    %c0_i32_0 = arith.constant 0 : i32
    %c0_i32_1 = arith.constant 0 : i32
    return %c0_i32, %c0_i32_0 : i32, i32
  }
  func.func @transform_3(%arg0: i32, %arg1: i32) -> (i32, i32, i32) {
    %c0_i32 = arith.constant 0 : i32
    %c0_i32_0 = arith.constant 0 : i32
    return %arg0, %c0_i32, %arg1 : i32, i32, i32
  }
}

</mosaic_0001>

<llo_original>
// kernel: out_conv.1
$region0: #{out_conv.1}
  #allocation0 [shape = 'u32[]', space=smem, size = 0x4, offset = 0x4, fixed_abs, tag = 'smem constant byte address 0x4 - core index']
  #allocation1 [shape = 'u32[72,128]{1,0:T(1,128)}', space=vmem, size = 0x9000, scoped, tag = 'internal scratch']
  %s0 = inlined_call_operand.vmem [shape: f32[2,64,256], index: 0, kind: input, shape index: {}]
  %s1 = inlined_call_operand.vmem [shape: f32[8,64], index: 1, kind: input, shape index: {}]
  %s2 = inlined_call_operand.vmem [shape: f32[8,1], index: 2, kind: input, shape index: {}]
  %s3 = inlined_call_operand.vmem [shape: f32[2,8,256], index: 3, kind: output, shape index: {}]
  %s4 = sld [smem:[#allocation0]]
  $region45: #{out_conv.1} parent=0
    _
  %s6 = ssub.s32 1, %s4
  %s7 = scalar_select 0, %s6, %s4
  loop: start=0, step=1, limit=4
  $region2: #{out_conv.1} parent=0 // loop_pre_header
    _
  $region3: #{out_conv.1} parent=0 // loop_header
    %s9 = sphi 0, %s13
    %p10 = scmp.ge.s32.totalorder %s9, 4
    %s16 = sphi 0, %s28
    %s17 = sphi 0, %s24
    %s18 = sphi 0, %s16
    %s19 = sphi 0, %s17
    %s20 = sphi 0, %s18
    %s21 = sphi 0, %s19
    %s33 = sphi 0, %s35
    %s36 = sphi 0, %s33
    %s37 = sphi 0, %s36
    %s53 = sphi 0, %s37
    %s57 = sphi 0, %s57
    %s59 = sphi 0, %s57
    %s60 = sphi 0, %s59
    %s74 = sphi 0, %s60
    %s78 = sphi 0, %s78
    %s80 = sphi 0, %s78
    %s81 = sphi 0, %s80
    %s95 = sphi 0, %s81
    %s103 = sphi 0, %s105
    %s106 = sphi 0, %s103
    %s107 = sphi 0, %s106
    %s123 = sphi 0, %s107
  $region4: #{out_conv.1} parent=0 // loop_header_branch
    %12 = sbr.rel (%p10) target = $region8
  $region5: #{out_conv.1} parent=0 // loop_body
    %s14 = ssub.s32 %s9, 1
    %s15 = ssub.s32 %s9, 2
    %s22 = sadd.s32 1, %s17
    %p23 = scmp.ge.s32.totalorder %s22, 1
    %s24 = scalar_select %p23, 0, %s22
    %s25 = sadd.s32 1, %s16
    %s26 = scalar_select %p23, %s25, %s16
    %p27 = scmp.ge.s32.totalorder %s26, 2
    %s28 = scalar_select %p27, 0, %s26
    %s29 = ssub.s32 %s16, %s28
    %s30 = ssub.s32 %s17, %s24
    %s31 = sor.u32 %s29, %s30
    %p32 = scmp.eq.s32.totalorder %s31, 0
    %s34 = sadd.s32 %s33, 1
    %s35 = scalar_select %p32, %s33, %s34
    %p38 = pneg %p32
    %p39 = scmp.eq.s32.totalorder %s9, 1
    %p40 = por %p38, %p39
    %p41 = scmp.ne.s32.totalorder %s33, %s36
    %p42 = scmp.eq.s32.totalorder %s9, 0
    %p43 = por %p41, %p42
    %p44 = scmp.ne.s32.totalorder %s33, %s36
    %p45 = scmp.eq.s32.totalorder %s14, 1
    %p46 = por %p44, %p45
    %p47 = scmp.ne.s32.totalorder %s36, %s37
    %p48 = scmp.eq.s32.totalorder %s14, 0
    %p49 = por %p47, %p48
    %p50 = scmp.ne.s32.totalorder %s36, %s37
    %p51 = scmp.eq.s32.totalorder %s15, 1
    %p52 = por %p50, %p51
    %p54 = scmp.ne.s32.totalorder %s37, %s53
    %p55 = scmp.eq.s32.totalorder %s15, 0
    %p56 = por %p54, %p55
    %s58 = sadd.s32 %s57, 1
    %p61 = scmp.eq.s32.totalorder %s9, 1
    %p62 = scmp.ne.s32.totalorder %s57, %s59
    %p63 = scmp.eq.s32.totalorder %s9, 0
    %p64 = por %p62, %p63
    %p65 = scmp.ne.s32.totalorder %s57, %s59
    %p66 = scmp.eq.s32.totalorder %s14, 1
    %p67 = por %p65, %p66
    %p68 = scmp.ne.s32.totalorder %s59, %s60
    %p69 = scmp.eq.s32.totalorder %s14, 0
    %p70 = por %p68, %p69
    %p71 = scmp.ne.s32.totalorder %s59, %s60
    %p72 = scmp.eq.s32.totalorder %s15, 1
    %p73 = por %p71, %p72
    %p75 = scmp.ne.s32.totalorder %s60, %s74
    %p76 = scmp.eq.s32.totalorder %s15, 0
    %p77 = por %p75, %p76
    %s79 = sadd.s32 %s78, 1
    %p82 = scmp.eq.s32.totalorder %s9, 1
    %p83 = scmp.ne.s32.totalorder %s78, %s80
    %p84 = scmp.eq.s32.totalorder %s9, 0
    %p85 = por %p83, %p84
    %p86 = scmp.ne.s32.totalorder %s78, %s80
    %p87 = scmp.eq.s32.totalorder %s14, 1
    %p88 = por %p86, %p87
    %p89 = scmp.ne.s32.totalorder %s80, %s81
    %p90 = scmp.eq.s32.totalorder %s14, 0
    %p91 = por %p89, %p90
    %p92 = scmp.ne.s32.totalorder %s80, %s81
    %p93 = scmp.eq.s32.totalorder %s15, 1
    %p94 = por %p92, %p93
    %p96 = scmp.ne.s32.totalorder %s81, %s95
    %p97 = scmp.eq.s32.totalorder %s15, 0
    %p98 = por %p96, %p97
    %s99 = ssub.s32 %s16, %s28
    %s100 = ssub.s32 %s17, %s24
    %s101 = sor.u32 %s99, %s100
    %p102 = scmp.eq.s32.totalorder %s101, 0
    %s104 = sadd.s32 %s103, 1
    %s105 = scalar_select %p102, %s103, %s104
    %p108 = pneg %p102
    %p109 = scmp.eq.s32.totalorder %s9, 1
    %p110 = por %p108, %p109
    %p111 = scmp.ne.s32.totalorder %s103, %s106
    %p112 = scmp.eq.s32.totalorder %s9, 0
    %p113 = por %p111, %p112
    %p114 = scmp.ne.s32.totalorder %s103, %s106
    %p115 = scmp.eq.s32.totalorder %s14, 1
    %p116 = por %p114, %p115
    %p117 = scmp.ne.s32.totalorder %s106, %s107
    %p118 = scmp.eq.s32.totalorder %s14, 0
    %p119 = por %p117, %p118
    %p120 = scmp.ne.s32.totalorder %s106, %s107
    %p121 = scmp.eq.s32.totalorder %s15, 1
    %p122 = por %p120, %p121
    %p124 = scmp.ne.s32.totalorder %s107, %s123
    %p125 = scmp.eq.s32.totalorder %s15, 0
    %p126 = por %p124, %p125
    %p127 = scmp.le.s32.totalorder 1, %s9
    %p128 = scmp.lt.s32.totalorder %s9, 3
    %p129 = pnand %p127, %p128
    %p130 = pneg %p129
    // Predicated region
    $region9: #{out_conv.1} parent=5 // pred_check
      _
    $region10: #{out_conv.1} parent=5 // pred_check_branch
      %132 = sbr.rel (%p129) target = $region12
    $region11: #{out_conv.1} parent=5 // pred_region
      %s133 = ssub.s32 %s9, 1
      // Predicated region
      $region13: #{out_conv.1} parent=11 // pred_check
        %p134 = pneg %p70
      $region14: #{out_conv.1} parent=11 // pred_check_branch
        %136 = sbr.rel (%p134) target = $region16
      $region15: #{out_conv.1} parent=11 // pred_region
        _
      $region16: #{out_conv.1} parent=11 // pred_fallthru
        _
      // Predicated region
      $region17: #{out_conv.1} parent=11 // pred_check
        %p137 = pneg %p91
      $region18: #{out_conv.1} parent=11 // pred_check_branch
        %139 = sbr.rel (%p137) target = $region20
      $region19: #{out_conv.1} parent=11 // pred_region
        _
      $region20: #{out_conv.1} parent=11 // pred_fallthru
        _
    $region12: #{out_conv.1} parent=5 // pred_fallthru
      _
    %p140 = scmp.lt.s32.totalorder %s9, 2
    // Predicated region
    $region21: #{out_conv.1} parent=5 // pred_check
      %p141 = pneg %p140
    $region22: #{out_conv.1} parent=5 // pred_check_branch
      %143 = sbr.rel (%p141) target = $region24
    $region23: #{out_conv.1} parent=5 // pred_region
      // Predicated region
      $region25: #{out_conv.1} parent=23 // pred_check
        %p144 = pneg %p43
      $region26: #{out_conv.1} parent=23 // pred_check_branch
        %146 = sbr.rel (%p144) target = $region28
      $region27: #{out_conv.1} parent=23 // pred_region
        %s147 = smul.u32 2, %s17
        %p148 = scmp.lt.s32.totalorder %s16, 1
        %s149 = scalar_select %p148, %s16, 1
        %p150 = scmp.lt.s32.totalorder %s147, 1
        %s151 = scalar_select %p150, %s147, 1
        %s152 = smul.addr %s149, 16
        %s153 = sadd.s32 %s151, %s152
        %s154 = smul.addr %s153, 8
        %s155 = scalar_lea.vmem %s0, %s154
        %s156 = smul.u32 2, %s17
      $region28: #{out_conv.1} parent=23 // pred_fallthru
        _
    $region24: #{out_conv.1} parent=5 // pred_fallthru
      _
    %p157 = scmp.le.s32.totalorder 1, %s9
    %p158 = scmp.lt.s32.totalorder %s9, 3
    %p159 = pnand %p157, %p158
    %p160 = pneg %p159
    // Predicated region
    $region29: #{out_conv.1} parent=5 // pred_check
      _
    $region30: #{out_conv.1} parent=5 // pred_check_branch
      %162 = sbr.rel (%p159) target = $region32
    $region31: #{out_conv.1} parent=5 // pred_region
      %s163 = ssub.s32 %s9, 1
      %s164 = smul.u32 2, %s19
      %p165 = scmp.lt.s32.totalorder %s18, 1
      %s166 = scalar_select %p165, %s18, 1
      %p167 = scmp.lt.s32.totalorder %s164, 1
      %s168 = scalar_select %p167, %s164, 1
      %s169 = smul.addr %s166, 16
      %s170 = sadd.s32 %s168, %s169
      %s171 = smul.addr %s170, 8
      %s172 = scalar_lea.vmem %s0, %s171
      %p173 = pneg %p49
      %p174 = pneg %p46
      %p175 = pneg %p70
      %p176 = pneg %p67
      %p177 = pneg %p91
      %p178 = pneg %p88
      %p179 = pneg %p119
      %p180 = pneg %p116
      %s181 = smul.u32 2, %s19
      %p182 = scmp.lt.s32.totalorder %s18, 1
      %s183 = scalar_select %p182, %s18, 1
      %p184 = scmp.lt.s32.totalorder %s181, 1
      %s185 = scalar_select %p184, %s181, 1
      %s186 = smul.addr %s183, 2
      %s187 = sadd.s32 %s185, %s186
      %s188 = smul.addr %s187, 8
      %s189 = scalar_lea.vmem %s3, %s188
      %s190 = smul.u32 2, %s19
      %p191 = scmp.lt.s32.totalorder %s18, 1
      %s192 = scalar_select %p191, %s18, 1
      %p193 = scmp.lt.s32.totalorder %s190, 1
      %s194 = scalar_select %p193, %s190, 1
      %s195 = smul.addr %s192, 16
      %s196 = sadd.s32 %s194, %s195
      %s197 = smul.addr %s196, 8
      %s198 = scalar_lea.vmem %s0, %s197
      %s199 = smul.u32 2, %s19
      %s200 = smul.u32 2, %s19
      %p201 = scmp.lt.s32.totalorder %s18, 1
      %s202 = scalar_select %p201, %s18, 1
      %p203 = scmp.lt.s32.totalorder %s200, 1
      %s204 = scalar_select %p203, %s200, 1
      %s205 = smul.addr %s202, 2
      %s206 = sadd.s32 %s204, %s205
      %s207 = smul.addr %s206, 8
      %s208 = scalar_lea.vmem %s3, %s207
      %s209 = smul.u32 2, %s19
      %v210 = vld [vmem:[%s1] sm:$0xff]
      %v211 = vld [vmem:[%s198] sm:$0xff]
      %v212 = vld [vmem:[%s198 + $0x8] sm:$0xff]
      %v213 = vld [vmem:[%s198 + $0x10] sm:$0xff]
      %v214 = vld [vmem:[%s198 + $0x18] sm:$0xff]
      %v215 = vld [vmem:[%s198 + $0x20] sm:$0xff]
      %v216 = vld [vmem:[%s198 + $0x28] sm:$0xff]
      %v217 = vld [vmem:[%s198 + $0x30] sm:$0xff]
      %v218 = vld [vmem:[%s198 + $0x38] sm:$0xff]
      %v219 = vld [vmem:[%s198 + $0x40] sm:$0xff]
      %v220 = vld [vmem:[%s198 + $0x48] sm:$0xff]
      %v221 = vld [vmem:[%s198 + $0x50] sm:$0xff]
      %v222 = vld [vmem:[%s198 + $0x58] sm:$0xff]
      %v223 = vld [vmem:[%s198 + $0x60] sm:$0xff]
      %v224 = vld [vmem:[%s198 + $0x68] sm:$0xff]
      %v225 = vld [vmem:[%s198 + $0x70] sm:$0xff]
      %v226 = vld [vmem:[%s198 + $0x78] sm:$0xff]
      %v227 = vld [vmem:[%s2] sm:$0xff]
      %229 = vset.pattern.permute.xlu0 0
      %230 = vperm.xlu0 %229, %v227
      %v231 = vpop.permute.xlu0 %230
      %vm233 = vcmask 523264
      %v235 = vsel %vm233, %v210, 0
      %237 = vmatpush.msra.mxu0 0.0
      %238 = vmatpush.msra.mxu0 0.0
      %239 = vmatpush.msra.mxu0 0.0
      %240 = vmatpush.msra.mxu0 0.0
      %241 = vmatpush.msra.mxu0 0.0
      %242 = vmatpush.msra.mxu0 0.0
      %243 = vmatpush.msra.mxu0 0.0
      %244 = vmatpush.msra.mxu0 0.0
      %245 = vmatpush.msra.mxu0 %v225
      %246 = vmatpush.msra.mxu0 %v223
      %247 = vmatpush.msra.mxu0 %v221
      %248 = vmatpush.msra.mxu0 %v219
      %249 = vmatpush.msra.mxu0 %v217
      %250 = vmatpush.msra.mxu0 %v215
      %251 = vmatpush.msra.mxu0 %v213
      %252 = vmatpush.msra.mxu0 %v211
      %253 = vmatmul.f32.gmra.mxu0 %v235
      %v254 = vpop.f32.mrf.mxu0
      %v255 = vadd.f32 %v231, %v254
      %256 = vdwg.mxu0
      %257 = vmatpush.msra.mxu0 0.0
      %258 = vmatpush.msra.mxu0 0.0
      %259 = vmatpush.msra.mxu0 0.0
      %260 = vmatpush.msra.mxu0 0.0
      %261 = vmatpush.msra.mxu0 0.0
      %262 = vmatpush.msra.mxu0 0.0
      %263 = vmatpush.msra.mxu0 0.0
      %264 = vmatpush.msra.mxu0 0.0
      %265 = vmatpush.msra.mxu0 %v226
      %266 = vmatpush.msra.mxu0 %v224
      %267 = vmatpush.msra.mxu0 %v222
      %268 = vmatpush.msra.mxu0 %v220
      %269 = vmatpush.msra.mxu0 %v218
      %270 = vmatpush.msra.mxu0 %v216
      %271 = vmatpush.msra.mxu0 %v214
      %272 = vmatpush.msra.mxu0 %v212
      %273 = vmatmul.f32.gmra.mxu0 %v235
      %v274 = vpop.f32.mrf.mxu0
      %v275 = vadd.f32 %v231, %v274
      %276 = vdwg.mxu0
      %277 = vst [vmem:[%s208] sm:$0xff] %v255
      %278 = vst [vmem:[%s208 + $0x8] sm:$0xff] %v275
      %s279 = smul.u32 2, %s19
      %p280 = scmp.lt.s32.totalorder %s18, 1
      %s281 = scalar_select %p280, %s18, 1
      %p282 = scmp.lt.s32.totalorder %s279, 1
      %s283 = scalar_select %p282, %s279, 1
      %s284 = smul.addr %s281, 2
      %s285 = sadd.s32 %s283, %s284
      %s286 = smul.addr %s285, 8
      %s287 = scalar_lea.vmem %s3, %s286
      // Predicated region
      $region33: #{out_conv.1} parent=31 // pred_check
        %p288 = pneg %p116
      $region34: #{out_conv.1} parent=31 // pred_check_branch
        %290 = sbr.rel (%p288) target = $region36
      $region35: #{out_conv.1} parent=31 // pred_region
        %s291 = smul.u32 2, %s19
      $region36: #{out_conv.1} parent=31 // pred_fallthru
        _
    $region32: #{out_conv.1} parent=5 // pred_fallthru
      _
    %p292 = scmp.le.s32.totalorder 2, %s9
    // Predicated region
    $region37: #{out_conv.1} parent=5 // pred_check
      %p293 = pneg %p292
    $region38: #{out_conv.1} parent=5 // pred_check_branch
      %295 = sbr.rel (%p293) target = $region40
    $region39: #{out_conv.1} parent=5 // pred_region
      %s296 = ssub.s32 %s9, 2
      // Predicated region
      $region41: #{out_conv.1} parent=39 // pred_check
        %p297 = pneg %p122
      $region42: #{out_conv.1} parent=39 // pred_check_branch
        %299 = sbr.rel (%p297) target = $region44
      $region43: #{out_conv.1} parent=39 // pred_region
        %s300 = smul.u32 2, %s21
        %p301 = scmp.lt.s32.totalorder %s20, 1
        %s302 = scalar_select %p301, %s20, 1
        %p303 = scmp.lt.s32.totalorder %s300, 1
        %s304 = scalar_select %p303, %s300, 1
        %s305 = smul.addr %s302, 2
        %s306 = sadd.s32 %s304, %s305
        %s307 = smul.addr %s306, 8
        %s308 = scalar_lea.vmem %s3, %s307
      $region44: #{out_conv.1} parent=39 // pred_fallthru
        _
    $region40: #{out_conv.1} parent=5 // pred_fallthru
      _
  $region6: #{out_conv.1} parent=0 // loop_footer
    %s13 = sadd.s32 1, %s9
  $region7: #{out_conv.1} parent=0 // loop_footer_branch
    %8 = sbr.rel target = $region3
  $region8: #{out_conv.1} parent=0 // loop_exit
    _

</llo_original>
